<compile_context>
chip_gen: v6e
topology: v6e:2x2x1
jax: 0.10.0
libtpu: 0.0.40
codegen_flags: <defaults>
</compile_context>

<pallas_src>
import jax
import jax.numpy as jnp
from jax.experimental import pallas as pl
from jax.experimental.pallas import tpu as pltpu


def _round_up(x, m):
    return (x + m - 1) // m * m


def _mlp_kernel(x_ref, *refs):
    """Fused MLP forward on one VMEM-resident batch tile.

    refs = (w1, b1, w2, b2, ..., wL, bL, o_ref).
    Weights arrive in the MXU operand dtype (bf16 by default); biases are f32.
    Dropout layers are identity (inference semantics).
    """
    o_ref = refs[-1]
    wb_refs = refs[:-1]
    n_layers = len(wb_refs) // 2
    compute_dtype = wb_refs[0].dtype

    # Cast to the MXU operand dtype inside the kernel (no extra HBM pass).
    h = x_ref[...].astype(compute_dtype)
    for i in range(n_layers):
        w = wb_refs[2 * i][...]
        b = wb_refs[2 * i + 1][...]
        # MXU matmul with f32 accumulation; bias add / ReLU on the VPU in f32.
        h = jnp.dot(h, w, preferred_element_type=jnp.float32) + b
        if i < n_layers - 1:
            h = jnp.maximum(h, 0.0).astype(compute_dtype)
    o_ref[...] = h.astype(o_ref.dtype)


def prepare_params(params, compute_dtype=jnp.bfloat16):
    """One-time parameter preparation (call once, reuse across forward calls).

    Casts weights to the MXU operand dtype; biases stay f32 with shape (1, out).
    No lane padding is applied — natural shapes go straight into the kernel.
    """
    prepared = []
    for (w, b) in params:
        prepared.append((jnp.asarray(w, compute_dtype),
                         jnp.asarray(b, jnp.float32).reshape(1, -1)))
    return prepared


def _pick_tile(batch, batch_tile):
    tile = min(int(batch_tile), _round_up(batch, 8))
    tile = max(8, (tile // 8) * 8)
    if tile >= 16:
        tile = (tile // 16) * 16  # bf16-friendly sublane multiple
    return tile


def mlp_forward(x, prepared_params, *, batch_tile=1024):
    """Run the fused MLP kernel.

    x:               [B, size_in] float32 (natural width, no padding)
    prepared_params: output of prepare_params()
    """
    B, size_in = x.shape
    assert prepared_params[0][0].shape[0] == size_in
    size_out = prepared_params[-1][0].shape[1]
    out_dtype = x.dtype

    tile = _pick_tile(B, batch_tile)
    grid = (pl.cdiv(B, tile),)  # ragged last block handled by Pallas masking

    flat_args = [x]
    in_specs = [pl.BlockSpec((tile, size_in), lambda i: (i, 0))]
    for (w, b) in prepared_params:
        flat_args.extend([w, b])
        # Full-array blocks with a constant index_map: weights stay VMEM-resident.
        in_specs.append(pl.BlockSpec(w.shape, lambda i: (0, 0)))
        in_specs.append(pl.BlockSpec(b.shape, lambda i: (0, 0)))

    flops = 2 * B * sum(w.shape[0] * w.shape[1] for w, _ in prepared_params)
    bytes_accessed = (
        x.size * x.dtype.itemsize
        + sum(w.size * w.dtype.itemsize + b.size * b.dtype.itemsize
              for w, b in prepared_params)
        + B * size_out * jnp.dtype(out_dtype).itemsize)

    out = pl.pallas_call(
        _mlp_kernel,
        out_shape=jax.ShapeDtypeStruct((B, size_out), out_dtype),
        grid=grid,
        in_specs=in_specs,
        out_specs=pl.BlockSpec((tile, size_out), lambda i: (i, 0)),
        compiler_params=pltpu.CompilerParams(
            dimension_semantics=("parallel",)),
        cost_estimate=pl.CostEstimate(
            flops=int(flops),
            transcendentals=0,
            bytes_accessed=int(bytes_accessed)),
    )(*flat_args)
    return out


def init_mlp_params(key, size_in, size_out, features=(64, 64, 64, 64)):
    """Deterministic parameter init (PyTorch-style uniform fan-in bounds)."""
    dims = [size_in] + list(features) + [size_out]
    params = []
    for i in range(len(dims) - 1):
        fan_in, fan_out = dims[i], dims[i + 1]
        key, kw, kb = jax.random.split(key, 3)
        bound = 1.0 / jnp.sqrt(jnp.float32(fan_in))
        w = jax.random.uniform(kw, (fan_in, fan_out), jnp.float32, -bound, bound)
        b = jax.random.uniform(kb, (1, fan_out), jnp.float32, -bound, bound)
        params.append((w, b))
    return params


def mlp_reference(x, params):
    """Pure-JAX reference for correctness checking."""
    h = x
    for i, (w, b) in enumerate(params):
        h = h @ w + b
        if i < len(params) - 1:
            h = jnp.maximum(h, 0.0)
    return h


if __name__ == "__main__":
    key = jax.random.PRNGKey(0)
    size_in, size_out = 32, 16
    batch = 8

    kx, kp = jax.random.split(key)
    x = jax.random.normal(kx, (batch, size_in), jnp.float32)
    params = init_mlp_params(kp, size_in, size_out)

    # TODO(synk): nn.Dropout has no deterministic Pallas equivalent matching
    # PyTorch's RNG stream; implemented as identity (eval mode).
    ref = mlp_reference(x, params)

    # f32 MXU operands: tight check against the reference.
    params_f32 = prepare_params(params, jnp.float32)
    out_f32 = jax.block_until_ready(mlp_forward(x, params_f32))
    assert out_f32.shape == (batch, size_out)
    assert jnp.allclose(out_f32, ref, atol=1e-4, rtol=1e-4), "f32 mismatch"

    # bf16 MXU operands (default fast path, f32 accumulation): loose check.
    params_bf16 = prepare_params(params)
    out_bf16 = jax.block_until_ready(mlp_forward(x, params_bf16))
    assert out_bf16.shape == (batch, size_out)
    assert jnp.allclose(out_bf16, ref, atol=1e-1, rtol=1e-1), "bf16 mismatch"

    # Ragged multi-tile path: grid = cdiv(1040, 512) = 3, partial last block.
    kx2, _ = jax.random.split(kx)
    x_big = jax.random.normal(kx2, (1040, size_in), jnp.float32)
    out_big = jax.block_until_ready(
        mlp_forward(x_big, params_f32, batch_tile=512))
    ref_big = mlp_reference(x_big, params)
    assert out_big.shape == (1040, size_out)
    assert jnp.allclose(out_big, ref_big, atol=1e-4, rtol=1e-4), "tiled mismatch"

    print("KERNEL_OK")
</pallas_src>

<mosaic_0001>
module attributes {stable_mosaic.version = 11 : i64} {
  func.func @_mlp_kernel(%arg0: i32, %arg1: memref<8x32xf32, #tpu.memory_space<vmem>>, %arg2: memref<32x64xf32, #tpu.memory_space<vmem>>, %arg3: memref<1x64xf32, #tpu.memory_space<vmem>>, %arg4: memref<64x64xf32, #tpu.memory_space<vmem>>, %arg5: memref<1x64xf32, #tpu.memory_space<vmem>>, %arg6: memref<64x64xf32, #tpu.memory_space<vmem>>, %arg7: memref<1x64xf32, #tpu.memory_space<vmem>>, %arg8: memref<64x64xf32, #tpu.memory_space<vmem>>, %arg9: memref<1x64xf32, #tpu.memory_space<vmem>>, %arg10: memref<64x16xf32, #tpu.memory_space<vmem>>, %arg11: memref<1x16xf32, #tpu.memory_space<vmem>>, %arg12: memref<8x16xf32, #tpu.memory_space<vmem>>) attributes {dimension_semantics = [#tpu.dimension_semantics<parallel>], iteration_bounds = array<i64: 1>, scalar_prefetch = 0 : i64, scratch_operands = 0 : i64, tpu.core_type = #tpu.core_type<tc>, window_params = [{transform_indices = @transform_0, window_bounds = array<i64: 8, 32>}, {pipeline_mode = #tpu.pipeline_mode<synchronous>, transform_indices = @transform_1, window_bounds = array<i64: 32, 64>}, {pipeline_mode = #tpu.pipeline_mode<synchronous>, transform_indices = @transform_2, window_bounds = array<i64: 1, 64>}, {pipeline_mode = #tpu.pipeline_mode<synchronous>, transform_indices = @transform_3, window_bounds = array<i64: 64, 64>}, {pipeline_mode = #tpu.pipeline_mode<synchronous>, transform_indices = @transform_4, window_bounds = array<i64: 1, 64>}, {pipeline_mode = #tpu.pipeline_mode<synchronous>, transform_indices = @transform_5, window_bounds = array<i64: 64, 64>}, {pipeline_mode = #tpu.pipeline_mode<synchronous>, transform_indices = @transform_6, window_bounds = array<i64: 1, 64>}, {pipeline_mode = #tpu.pipeline_mode<synchronous>, transform_indices = @transform_7, window_bounds = array<i64: 64, 64>}, {pipeline_mode = #tpu.pipeline_mode<synchronous>, transform_indices = @transform_8, window_bounds = array<i64: 1, 64>}, {pipeline_mode = #tpu.pipeline_mode<synchronous>, transform_indices = @transform_9, window_bounds = array<i64: 64, 16>}, {pipeline_mode = #tpu.pipeline_mode<synchronous>, transform_indices = @transform_10, window_bounds = array<i64: 1, 16>}, {transform_indices = @transform_11, window_bounds = array<i64: 8, 16>}]} {
    %c0 = arith.constant 0 : index
    %c0_0 = arith.constant 0 : index
    %0 = vector.load %arg1[%c0, %c0_0] : memref<8x32xf32, #tpu.memory_space<vmem>>, vector<8x32xf32>
    %c0_1 = arith.constant 0 : index
    %c0_2 = arith.constant 0 : index
    %1 = vector.load %arg2[%c0_1, %c0_2] : memref<32x64xf32, #tpu.memory_space<vmem>>, vector<32x64xf32>
    %c0_3 = arith.constant 0 : index
    %c0_4 = arith.constant 0 : index
    %2 = vector.load %arg3[%c0_3, %c0_4] : memref<1x64xf32, #tpu.memory_space<vmem>>, vector<1x64xf32>
    %cst = arith.constant dense<0.000000e+00> : vector<8x64xf32>
    %3 = tpu.matmul %0, %1, %cst {dimension_numbers = #tpu.dot_dimension_numbers<[1], [0], [0], [1], [0, 0, 1, 1], [], []>} : vector<8x32xf32>, vector<32x64xf32>, vector<8x64xf32> -> vector<8x64xf32>
    %4 = vector.broadcast %2 : vector<1x64xf32> to vector<8x64xf32>
    %5 = arith.addf %3, %4 : vector<8x64xf32>
    %cst_5 = arith.constant 0.000000e+00 : f32
    %6 = vector.broadcast %cst_5 : f32 to vector<8x64xf32>
    %7 = arith.maximumf %5, %6 : vector<8x64xf32>
    %c0_6 = arith.constant 0 : index
    %c0_7 = arith.constant 0 : index
    %8 = vector.load %arg4[%c0_6, %c0_7] : memref<64x64xf32, #tpu.memory_space<vmem>>, vector<64x64xf32>
    %c0_8 = arith.constant 0 : index
    %c0_9 = arith.constant 0 : index
    %9 = vector.load %arg5[%c0_8, %c0_9] : memref<1x64xf32, #tpu.memory_space<vmem>>, vector<1x64xf32>
    %cst_10 = arith.constant dense<0.000000e+00> : vector<8x64xf32>
    %10 = tpu.matmul %7, %8, %cst_10 {dimension_numbers = #tpu.dot_dimension_numbers<[1], [0], [0], [1], [0, 0, 1, 1], [], []>} : vector<8x64xf32>, vector<64x64xf32>, vector<8x64xf32> -> vector<8x64xf32>
    %11 = vector.broadcast %9 : vector<1x64xf32> to vector<8x64xf32>
    %12 = arith.addf %10, %11 : vector<8x64xf32>
    %cst_11 = arith.constant 0.000000e+00 : f32
    %13 = vector.broadcast %cst_11 : f32 to vector<8x64xf32>
    %14 = arith.maximumf %12, %13 : vector<8x64xf32>
    %c0_12 = arith.constant 0 : index
    %c0_13 = arith.constant 0 : index
    %15 = vector.load %arg6[%c0_12, %c0_13] : memref<64x64xf32, #tpu.memory_space<vmem>>, vector<64x64xf32>
    %c0_14 = arith.constant 0 : index
    %c0_15 = arith.constant 0 : index
    %16 = vector.load %arg7[%c0_14, %c0_15] : memref<1x64xf32, #tpu.memory_space<vmem>>, vector<1x64xf32>
    %cst_16 = arith.constant dense<0.000000e+00> : vector<8x64xf32>
    %17 = tpu.matmul %14, %15, %cst_16 {dimension_numbers = #tpu.dot_dimension_numbers<[1], [0], [0], [1], [0, 0, 1, 1], [], []>} : vector<8x64xf32>, vector<64x64xf32>, vector<8x64xf32> -> vector<8x64xf32>
    %18 = vector.broadcast %16 : vector<1x64xf32> to vector<8x64xf32>
    %19 = arith.addf %17, %18 : vector<8x64xf32>
    %cst_17 = arith.constant 0.000000e+00 : f32
    %20 = vector.broadcast %cst_17 : f32 to vector<8x64xf32>
    %21 = arith.maximumf %19, %20 : vector<8x64xf32>
    %c0_18 = arith.constant 0 : index
    %c0_19 = arith.constant 0 : index
    %22 = vector.load %arg8[%c0_18, %c0_19] : memref<64x64xf32, #tpu.memory_space<vmem>>, vector<64x64xf32>
    %c0_20 = arith.constant 0 : index
    %c0_21 = arith.constant 0 : index
    %23 = vector.load %arg9[%c0_20, %c0_21] : memref<1x64xf32, #tpu.memory_space<vmem>>, vector<1x64xf32>
    %cst_22 = arith.constant dense<0.000000e+00> : vector<8x64xf32>
    %24 = tpu.matmul %21, %22, %cst_22 {dimension_numbers = #tpu.dot_dimension_numbers<[1], [0], [0], [1], [0, 0, 1, 1], [], []>} : vector<8x64xf32>, vector<64x64xf32>, vector<8x64xf32> -> vector<8x64xf32>
    %25 = vector.broadcast %23 : vector<1x64xf32> to vector<8x64xf32>
    %26 = arith.addf %24, %25 : vector<8x64xf32>
    %cst_23 = arith.constant 0.000000e+00 : f32
    %27 = vector.broadcast %cst_23 : f32 to vector<8x64xf32>
    %28 = arith.maximumf %26, %27 : vector<8x64xf32>
    %c0_24 = arith.constant 0 : index
    %c0_25 = arith.constant 0 : index
    %29 = vector.load %arg10[%c0_24, %c0_25] : memref<64x16xf32, #tpu.memory_space<vmem>>, vector<64x16xf32>
    %c0_26 = arith.constant 0 : index
    %c0_27 = arith.constant 0 : index
    %30 = vector.load %arg11[%c0_26, %c0_27] : memref<1x16xf32, #tpu.memory_space<vmem>>, vector<1x16xf32>
    %cst_28 = arith.constant dense<0.000000e+00> : vector<8x16xf32>
    %31 = tpu.matmul %28, %29, %cst_28 {dimension_numbers = #tpu.dot_dimension_numbers<[1], [0], [0], [1], [0, 0, 1, 1], [], []>} : vector<8x64xf32>, vector<64x16xf32>, vector<8x16xf32> -> vector<8x16xf32>
    %32 = vector.broadcast %30 : vector<1x16xf32> to vector<8x16xf32>
    %33 = arith.addf %31, %32 : vector<8x16xf32>
    %c0_29 = arith.constant 0 : index
    %c0_30 = arith.constant 0 : index
    %34 = vector.load %arg12[%c0_29, %c0_30] : memref<8x16xf32, #tpu.memory_space<vmem>>, vector<8x16xf32>
    tpu.vector_store %arg12[%c0_29, %c0_30], %33 {strides = array<i32>} : memref<8x16xf32, #tpu.memory_space<vmem>>, vector<8x16xf32>,
    return
  }
  func.func @transform_0(%arg0: i32) -> (i32, i32) {
    %c0_i32 = arith.constant 0 : i32
    %c0_i32_0 = arith.constant 0 : i32
    return %arg0, %c0_i32 : i32, i32
  }
  func.func @transform_1(%arg0: i32) -> (i32, i32) {
    %c0_i32 = arith.constant 0 : i32
    %c0_i32_0 = arith.constant 0 : i32
    %c0_i32_1 = arith.constant 0 : i32
    return %c0_i32, %c0_i32_0 : i32, i32
  }
  func.func @transform_2(%arg0: i32) -> (i32, i32) {
    %c0_i32 = arith.constant 0 : i32
    %c0_i32_0 = arith.constant 0 : i32
    %c0_i32_1 = arith.constant 0 : i32
    return %c0_i32, %c0_i32_0 : i32, i32
  }
  func.func @transform_3(%arg0: i32) -> (i32, i32) {
    %c0_i32 = arith.constant 0 : i32
    %c0_i32_0 = arith.constant 0 : i32
    %c0_i32_1 = arith.constant 0 : i32
    return %c0_i32, %c0_i32_0 : i32, i32
  }
  func.func @transform_4(%arg0: i32) -> (i32, i32) {
    %c0_i32 = arith.constant 0 : i32
    %c0_i32_0 = arith.constant 0 : i32
    %c0_i32_1 = arith.constant 0 : i32
    return %c0_i32, %c0_i32_0 : i32, i32
  }
  func.func @transform_5(%arg0: i32) -> (i32, i32) {
    %c0_i32 = arith.constant 0 : i32
    %c0_i32_0 = arith.constant 0 : i32
    %c0_i32_1 = arith.constant 0 : i32
    return %c0_i32, %c0_i32_0 : i32, i32
  }
  func.func @transform_6(%arg0: i32) -> (i32, i32) {
    %c0_i32 = arith.constant 0 : i32
    %c0_i32_0 = arith.constant 0 : i32
    %c0_i32_1 = arith.constant 0 : i32
    return %c0_i32, %c0_i32_0 : i32, i32
  }
  func.func @transform_7(%arg0: i32) -> (i32, i32) {
    %c0_i32 = arith.constant 0 : i32
    %c0_i32_0 = arith.constant 0 : i32
    %c0_i32_1 = arith.constant 0 : i32
    return %c0_i32, %c0_i32_0 : i32, i32
  }
  func.func @transform_8(%arg0: i32) -> (i32, i32) {
    %c0_i32 = arith.constant 0 : i32
    %c0_i32_0 = arith.constant 0 : i32
    %c0_i32_1 = arith.constant 0 : i32
    return %c0_i32, %c0_i32_0 : i32, i32
  }
  func.func @transform_9(%arg0: i32) -> (i32, i32) {
    %c0_i32 = arith.constant 0 : i32
    %c0_i32_0 = arith.constant 0 : i32
    %c0_i32_1 = arith.constant 0 : i32
    return %c0_i32, %c0_i32_0 : i32, i32
  }
  func.func @transform_10(%arg0: i32) -> (i32, i32) {
    %c0_i32 = arith.constant 0 : i32
    %c0_i32_0 = arith.constant 0 : i32
    %c0_i32_1 = arith.constant 0 : i32
    return %c0_i32, %c0_i32_0 : i32, i32
  }
  func.func @transform_11(%arg0: i32) -> (i32, i32) {
    %c0_i32 = arith.constant 0 : i32
    %c0_i32_0 = arith.constant 0 : i32
    return %arg0, %c0_i32 : i32, i32
  }
}

</mosaic_0001>

<llo_original>
// kernel: tpu_custom_call.1
$region0: #{tpu_custom_call.1}
  #allocation0 [shape = 'u32[]', space=smem, size = 0x4, offset = 0x4, fixed_abs, tag = 'smem constant byte address 0x4 - core index']
  #allocation1 [shape = 'u32[144,128]{1,0:T(1,128)}', space=vmem, size = 0x12000, scoped, tag = 'internal scratch']
  %s0 = inlined_call_operand.vmem [shape: f32[8,32], index: 0, kind: input, shape index: {}]
  %s1 = inlined_call_operand.hbm [shape: f32[32,64], index: 1, kind: input, shape index: {}]
  %s2 = inlined_call_operand.vmem [shape: f32[1,64], index: 2, kind: input, shape index: {}]
  %s3 = inlined_call_operand.vmem [shape: f32[64,64], index: 3, kind: input, shape index: {}]
  %s4 = inlined_call_operand.vmem [shape: f32[1,64], index: 4, kind: input, shape index: {}]
  %s5 = inlined_call_operand.hbm [shape: f32[64,64], index: 5, kind: input, shape index: {}]
  %s6 = inlined_call_operand.vmem [shape: f32[1,64], index: 6, kind: input, shape index: {}]
  %s7 = inlined_call_operand.hbm [shape: f32[64,64], index: 7, kind: input, shape index: {}]
  %s8 = inlined_call_operand.vmem [shape: f32[1,64], index: 8, kind: input, shape index: {}]
  %s9 = inlined_call_operand.vmem [shape: f32[64,16], index: 9, kind: input, shape index: {}]
  %s10 = inlined_call_operand.vmem [shape: f32[1,16], index: 10, kind: input, shape index: {}]
  %s11 = inlined_call_operand.hbm [shape: f32[8,16], index: 11, kind: output, shape index: {}]
  %s12 = sld [smem:[#allocation0]]
  $region66: #{tpu_custom_call.1} parent=0
    _
  %s14 = ssub.s32 1, %s12
  %s15 = scalar_select 0, %s14, %s12
  $region1: #{tpu_custom_call.1} parent=0
    #allocation2 [shape = 'u8[16384]{0}', space=vmem, size = 0x4000, scoped, tag = 'input window, operand 1, single buffered']
    #allocation3 [shape = 's32[1]{0}', space=sflag, size = 0x4, scoped, tag = 'scoped memory for tpu_custom_call.1']
    #allocation4 [shape = 's32[1]{0}', space=sflag, size = 0x4, scoped, tag = 'scoped memory for tpu_custom_call.1']
    #allocation5 [shape = 'u8[32768]{0}', space=vmem, size = 0x8000, scoped, tag = 'input window, operand 5, single buffered']
    #allocation6 [shape = 's32[1]{0}', space=sflag, size = 0x4, scoped, tag = 'scoped memory for tpu_custom_call.1']
    #allocation7 [shape = 'u8[32768]{0}', space=vmem, size = 0x8000, scoped, tag = 'input window, operand 7, single buffered']
    #allocation8 [shape = 'u8[4096]{0}', space=vmem, size = 0x1000, scoped, tag = 'output window, operand 0, single buffered']
    %16 = vsyncpa [#allocation3], 0
    %17 = vsyncpa [#allocation6], 0
    %18 = vsyncpa [#allocation4], 0
    // Predicated region
    $region2: #{tpu_custom_call.1} parent=1 // pred_check
      _
    $region3: #{tpu_custom_call.1} parent=1 // pred_check_branch
      %20 = sbr.rel (0) target = $region5
    $region4: #{tpu_custom_call.1} parent=1 // pred_region
      _
    $region5: #{tpu_custom_call.1} parent=1 // pred_fallthru
      _
    // Predicated region
    $region6: #{tpu_custom_call.1} parent=1 // pred_check
      _
    $region7: #{tpu_custom_call.1} parent=1 // pred_check_branch
      %22 = sbr.rel (0) target = $region9
    $region8: #{tpu_custom_call.1} parent=1 // pred_region
      %s24 = ssub.s32 512, 512
      %25 = vsyncadd [#allocation3], %s24
      %s26 = sshll.u32 [#allocation2], 4
      %s27 = int_to_ptr.vmem [resolvable:$true] %s26
      %32 = dma.hbm_to_vmem [thread:$0]  %s1, 512, %s27, [#allocation3], 128, 128, 8
    $region9: #{tpu_custom_call.1} parent=1 // pred_fallthru
      _
    // Predicated region
    $region10: #{tpu_custom_call.1} parent=1 // pred_check
      _
    $region11: #{tpu_custom_call.1} parent=1 // pred_check_branch
      %34 = sbr.rel (0) target = $region13
    $region12: #{tpu_custom_call.1} parent=1 // pred_region
      _
    $region13: #{tpu_custom_call.1} parent=1 // pred_fallthru
      _
    // Predicated region
    $region14: #{tpu_custom_call.1} parent=1 // pred_check
      _
    $region15: #{tpu_custom_call.1} parent=1 // pred_check_branch
      %36 = sbr.rel (0) target = $region17
    $region16: #{tpu_custom_call.1} parent=1 // pred_region
      _
    $region17: #{tpu_custom_call.1} parent=1 // pred_fallthru
      _
    // Predicated region
    $region18: #{tpu_custom_call.1} parent=1 // pred_check
      _
    $region19: #{tpu_custom_call.1} parent=1 // pred_check_branch
      %38 = sbr.rel (0) target = $region21
    $region20: #{tpu_custom_call.1} parent=1 // pred_region
      _
    $region21: #{tpu_custom_call.1} parent=1 // pred_fallthru
      _
    // Predicated region
    $region22: #{tpu_custom_call.1} parent=1 // pred_check
      _
    $region23: #{tpu_custom_call.1} parent=1 // pred_check_branch
      %40 = sbr.rel (0) target = $region25
    $region24: #{tpu_custom_call.1} parent=1 // pred_region
      %s42 = ssub.s32 1024, 1024
      %43 = vsyncadd [#allocation6], %s42
      %s44 = sshll.u32 [#allocation5], 4
      %s45 = int_to_ptr.vmem [resolvable:$true] %s44
      %50 = dma.hbm_to_vmem [thread:$0]  %s5, 1024, %s45, [#allocation6], 128, 128, 8
    $region25: #{tpu_custom_call.1} parent=1 // pred_fallthru
      _
    // Predicated region
    $region26: #{tpu_custom_call.1} parent=1 // pred_check
      _
    $region27: #{tpu_custom_call.1} parent=1 // pred_check_branch
      %52 = sbr.rel (0) target = $region29
    $region28: #{tpu_custom_call.1} parent=1 // pred_region
      _
    $region29: #{tpu_custom_call.1} parent=1 // pred_fallthru
      _
    // Predicated region
    $region30: #{tpu_custom_call.1} parent=1 // pred_check
      _
    $region31: #{tpu_custom_call.1} parent=1 // pred_check_branch
      %54 = sbr.rel (0) target = $region33
    $region32: #{tpu_custom_call.1} parent=1 // pred_region
      %s56 = ssub.s32 1024, 1024
      %57 = vsyncadd [#allocation6], %s56
      %s58 = sshll.u32 [#allocation7], 4
      %s59 = int_to_ptr.vmem [resolvable:$true] %s58
      %64 = dma.hbm_to_vmem [thread:$0]  %s7, 1024, %s59, [#allocation6], 128, 128, 8
    $region33: #{tpu_custom_call.1} parent=1 // pred_fallthru
      _
    // Predicated region
    $region34: #{tpu_custom_call.1} parent=1 // pred_check
      _
    $region35: #{tpu_custom_call.1} parent=1 // pred_check_branch
      %66 = sbr.rel (0) target = $region37
    $region36: #{tpu_custom_call.1} parent=1 // pred_region
      _
    $region37: #{tpu_custom_call.1} parent=1 // pred_fallthru
      _
    // Predicated region
    $region38: #{tpu_custom_call.1} parent=1 // pred_check
      _
    $region39: #{tpu_custom_call.1} parent=1 // pred_check_branch
      %68 = sbr.rel (0) target = $region41
    $region40: #{tpu_custom_call.1} parent=1 // pred_region
      _
    $region41: #{tpu_custom_call.1} parent=1 // pred_fallthru
      _
    // Predicated region
    $region42: #{tpu_custom_call.1} parent=1 // pred_check
      _
    $region43: #{tpu_custom_call.1} parent=1 // pred_check_branch
      %70 = sbr.rel (0) target = $region45
    $region44: #{tpu_custom_call.1} parent=1 // pred_region
      _
    $region45: #{tpu_custom_call.1} parent=1 // pred_fallthru
      _
    // Predicated region
    $region46: #{tpu_custom_call.1} parent=1 // pred_check
      _
    $region47: #{tpu_custom_call.1} parent=1 // pred_check_branch
      %72 = sbr.rel (0) target = $region49
    $region48: #{tpu_custom_call.1} parent=1 // pred_region
      %73 = dma.done [#allocation3], 512
    $region49: #{tpu_custom_call.1} parent=1 // pred_fallthru
      _
    // Predicated region
    $region50: #{tpu_custom_call.1} parent=1 // pred_check
      _
    $region51: #{tpu_custom_call.1} parent=1 // pred_check_branch
      %75 = sbr.rel (0) target = $region53
    $region52: #{tpu_custom_call.1} parent=1 // pred_region
      %76 = dma.done [#allocation6], 1024
    $region53: #{tpu_custom_call.1} parent=1 // pred_fallthru
      _
    // Predicated region
    $region54: #{tpu_custom_call.1} parent=1 // pred_check
      _
    $region55: #{tpu_custom_call.1} parent=1 // pred_check_branch
      %78 = sbr.rel (0) target = $region57
    $region56: #{tpu_custom_call.1} parent=1 // pred_region
      %79 = dma.done [#allocation6], 1024
    $region57: #{tpu_custom_call.1} parent=1 // pred_fallthru
      _
    %v80 = vld [vmem:[%s0] sm:$0xff]
    %v81 = vld [vmem:[#allocation2] sm:$0xff]
    %v82 = vld [vmem:[#allocation2 + $0x8] sm:$0xff]
    %v83 = vld [vmem:[#allocation2 + $0x10] sm:$0xff]
    %v84 = vld [vmem:[#allocation2 + $0x18] sm:$0xff]
    %v85 = vld [vmem:[%s2] sm:$0x1]
    %v87 = vlaneseq
    %v88 = vshrl.u32 %v87, 7
    %v89 = vsub.s32 0, %v88
    %v90 = vrot.slane %v85, %v89
    %vm92 = vcmask 261120
    %v94 = vsel %vm92, %v80, 0
    %96 = vmatprep.subr.mxu0 0.0
    %97 = vmatpush1.msra.mxu0 0.0
    %98 = vmatprep.subr.mxu0 0.0
    %99 = vmatpush1.msra.mxu0 0.0
    %100 = vmatprep.subr.mxu0 0.0
    %101 = vmatpush1.msra.mxu0 0.0
    %102 = vmatprep.subr.mxu0 0.0
    %103 = vmatpush1.msra.mxu0 0.0
    %104 = vmatprep.subr.mxu0 0.0
    %105 = vmatpush1.msra.mxu0 0.0
    %106 = vmatprep.subr.mxu0 0.0
    %107 = vmatpush1.msra.mxu0 0.0
    %108 = vmatprep.subr.mxu0 0.0
    %109 = vmatpush1.msra.mxu0 0.0
    %110 = vmatprep.subr.mxu0 0.0
    %111 = vmatpush1.msra.mxu0 0.0
    %112 = vmatprep.subr.mxu0 0.0
    %113 = vmatpush1.msra.mxu0 0.0
    %114 = vmatprep.subr.mxu0 0.0
    %115 = vmatpush1.msra.mxu0 0.0
    %116 = vmatprep.subr.mxu0 0.0
    %117 = vmatpush1.msra.mxu0 0.0
    %118 = vmatprep.subr.mxu0 0.0
    %119 = vmatpush1.msra.mxu0 0.0
    %120 = vmatprep.subr.mxu0 0.0
    %121 = vmatpush1.msra.mxu0 %v84
    %122 = vmatprep.subr.mxu0 0.0
    %123 = vmatpush1.msra.mxu0 %v83
    %124 = vmatprep.subr.mxu0 0.0
    %125 = vmatpush1.msra.mxu0 %v82
    %126 = vmatprep.subr.mxu0 0.0
    %127 = vmatpush1.msra.mxu0 %v81
    %128 = vmatprep.subr.mxu0 0.0
    %129 = vmatpush2.msra.mxu0 0.0
    %130 = vmatprep.subr.mxu0 0.0
    %131 = vmatpush2.msra.mxu0 0.0
    %132 = vmatprep.subr.mxu0 0.0
    %133 = vmatpush2.msra.mxu0 0.0
    %134 = vmatprep.subr.mxu0 0.0
    %135 = vmatpush2.msra.mxu0 0.0
    %136 = vmatprep.subr.mxu0 0.0
    %137 = vmatpush2.msra.mxu0 0.0
    %138 = vmatprep.subr.mxu0 0.0
    %139 = vmatpush2.msra.mxu0 0.0
    %140 = vmatprep.subr.mxu0 0.0
    %141 = vmatpush2.msra.mxu0 0.0
    %142 = vmatprep.subr.mxu0 0.0
    %143 = vmatpush2.msra.mxu0 0.0
    %144 = vmatprep.subr.mxu0 0.0
    %145 = vmatpush2.msra.mxu0 0.0
    %146 = vmatprep.subr.mxu0 0.0
    %147 = vmatpush2.msra.mxu0 0.0
    %148 = vmatprep.subr.mxu0 0.0
    %149 = vmatpush2.msra.mxu0 0.0
    %150 = vmatprep.subr.mxu0 0.0
    %151 = vmatpush2.msra.mxu0 0.0
    %152 = vmatprep.subr.mxu0 0.0
    %153 = vmatpush2.msra.mxu0 0.0
    %154 = vmatprep.subr.mxu0 0.0
    %155 = vmatpush2.msra.mxu0 0.0
    %156 = vmatprep.subr.mxu0 0.0
    %157 = vmatpush2.msra.mxu0 0.0
    %158 = vmatprep.subr.mxu0 0.0
    %159 = vmatpush2.msra.mxu0 0.0
    %160 = vmatprep.mubr.f32.mxu0 0.0
    %161 = vmatmul.mubr.f32.gmra.mxu0 %v94
    %v162 = vpop.f32.mrf.mxu0
    %v163 = vadd.f32 %v90, %v162
    %v164 = vpop.f32.mrf.mxu0
    %165 = vdwg.mxu0
    %v166 = vmax.f32 %v163, 0.0
    %v167 = vld [vmem:[%s3] sm:$0xff]
    %v168 = vld [vmem:[%s3 + $0x8] sm:$0xff]
    %v169 = vld [vmem:[%s3 + $0x10] sm:$0xff]
    %v170 = vld [vmem:[%s3 + $0x18] sm:$0xff]
    %v171 = vld [vmem:[%s3 + $0x20] sm:$0xff]
    %v172 = vld [vmem:[%s3 + $0x28] sm:$0xff]
    %v173 = vld [vmem:[%s3 + $0x30] sm:$0xff]
    %v174 = vld [vmem:[%s3 + $0x38] sm:$0xff]
    %v175 = vld [vmem:[%s4] sm:$0x1]
    %v177 = vlaneseq
    %v178 = vshrl.u32 %v177, 7
    %v179 = vsub.s32 0, %v178
    %v180 = vrot.slane %v175, %v179
    %vm182 = vcmask 523264
    %v184 = vsel %vm182, %v166, 0
    %186 = vmatprep.subr.mxu0 0.0
    %187 = vmatpush1.msra.mxu0 0.0
    %188 = vmatprep.subr.mxu0 0.0
    %189 = vmatpush1.msra.mxu0 0.0
    %190 = vmatprep.subr.mxu0 0.0
    %191 = vmatpush1.msra.mxu0 0.0
    %192 = vmatprep.subr.mxu0 0.0
    %193 = vmatpush1.msra.mxu0 0.0
    %194 = vmatprep.subr.mxu0 0.0
    %195 = vmatpush1.msra.mxu0 0.0
    %196 = vmatprep.subr.mxu0 0.0
    %197 = vmatpush1.msra.mxu0 0.0
    %198 = vmatprep.subr.mxu0 0.0
    %199 = vmatpush1.msra.mxu0 0.0
    %200 = vmatprep.subr.mxu0 0.0
    %201 = vmatpush1.msra.mxu0 0.0
    %202 = vmatprep.subr.mxu0 0.0
    %203 = vmatpush1.msra.mxu0 %v174
    %204 = vmatprep.subr.mxu0 0.0
    %205 = vmatpush1.msra.mxu0 %v173
    %206 = vmatprep.subr.mxu0 0.0
    %207 = vmatpush1.msra.mxu0 %v172
    %208 = vmatprep.subr.mxu0 0.0
    %209 = vmatpush1.msra.mxu0 %v171
    %210 = vmatprep.subr.mxu0 0.0
    %211 = vmatpush1.msra.mxu0 %v170
    %212 = vmatprep.subr.mxu0 0.0
    %213 = vmatpush1.msra.mxu0 %v169
    %214 = vmatprep.subr.mxu0 0.0
    %215 = vmatpush1.msra.mxu0 %v168
    %216 = vmatprep.subr.mxu0 0.0
    %217 = vmatpush1.msra.mxu0 %v167
    %218 = vmatprep.subr.mxu0 0.0
    %219 = vmatpush2.msra.mxu0 0.0
    %220 = vmatprep.subr.mxu0 0.0
    %221 = vmatpush2.msra.mxu0 0.0
    %222 = vmatprep.subr.mxu0 0.0
    %223 = vmatpush2.msra.mxu0 0.0
    %224 = vmatprep.subr.mxu0 0.0
    %225 = vmatpush2.msra.mxu0 0.0
    %226 = vmatprep.subr.mxu0 0.0
    %227 = vmatpush2.msra.mxu0 0.0
    %228 = vmatprep.subr.mxu0 0.0
    %229 = vmatpush2.msra.mxu0 0.0
    %230 = vmatprep.subr.mxu0 0.0
    %231 = vmatpush2.msra.mxu0 0.0
    %232 = vmatprep.subr.mxu0 0.0
    %233 = vmatpush2.msra.mxu0 0.0
    %234 = vmatprep.subr.mxu0 0.0
    %235 = vmatpush2.msra.mxu0 0.0
    %236 = vmatprep.subr.mxu0 0.0
    %237 = vmatpush2.msra.mxu0 0.0
    %238 = vmatprep.subr.mxu0 0.0
    %239 = vmatpush2.msra.mxu0 0.0
    %240 = vmatprep.subr.mxu0 0.0
    %241 = vmatpush2.msra.mxu0 0.0
    %242 = vmatprep.subr.mxu0 0.0
    %243 = vmatpush2.msra.mxu0 0.0
    %244 = vmatprep.subr.mxu0 0.0
    %245 = vmatpush2.msra.mxu0 0.0
    %246 = vmatprep.subr.mxu0 0.0
    %247 = vmatpush2.msra.mxu0 0.0
    %248 = vmatprep.subr.mxu0 0.0
    %249 = vmatpush2.msra.mxu0 0.0
    %250 = vmatprep.mubr.f32.mxu0 0.0
    %251 = vmatmul.mubr.f32.gmra.mxu0 %v184
    %v252 = vpop.f32.mrf.mxu0
    %v253 = vadd.f32 %v180, %v252
    %v254 = vpop.f32.mrf.mxu0
    %255 = vdwg.mxu0
    %v256 = vmax.f32 %v253, 0.0
    %v257 = vld [vmem:[#allocation5] sm:$0xff]
    %v258 = vld [vmem:[#allocation5 + $0x8] sm:$0xff]
    %v259 = vld [vmem:[#allocation5 + $0x10] sm:$0xff]
    %v260 = vld [vmem:[#allocation5 + $0x18] sm:$0xff]
    %v261 = vld [vmem:[#allocation5 + $0x20] sm:$0xff]
    %v262 = vld [vmem:[#allocation5 + $0x28] sm:$0xff]
    %v263 = vld [vmem:[#allocation5 + $0x30] sm:$0xff]
    %v264 = vld [vmem:[#allocation5 + $0x38] sm:$0xff]
    %v265 = vld [vmem:[%s6] sm:$0x1]
    %v267 = vlaneseq
    %v268 = vshrl.u32 %v267, 7
    %v269 = vsub.s32 0, %v268
    %v270 = vrot.slane %v265, %v269
    %v273 = vsel %vm182, %v256, 0
    %275 = vmatprep.subr.mxu0 0.0
    %276 = vmatpush1.msra.mxu0 0.0
    %277 = vmatprep.subr.mxu0 0.0
    %278 = vmatpush1.msra.mxu0 0.0
    %279 = vmatprep.subr.mxu0 0.0
    %280 = vmatpush1.msra.mxu0 0.0
    %281 = vmatprep.subr.mxu0 0.0
    %282 = vmatpush1.msra.mxu0 0.0
    %283 = vmatprep.subr.mxu0 0.0
    %284 = vmatpush1.msra.mxu0 0.0
    %285 = vmatprep.subr.mxu0 0.0
    %286 = vmatpush1.msra.mxu0 0.0
    %287 = vmatprep.subr.mxu0 0.0
    %288 = vmatpush1.msra.mxu0 0.0
    %289 = vmatprep.subr.mxu0 0.0
    %290 = vmatpush1.msra.mxu0 0.0
    %291 = vmatprep.subr.mxu0 0.0
    %292 = vmatpush1.msra.mxu0 %v264
    %293 = vmatprep.subr.mxu0 0.0
    %294 = vmatpush1.msra.mxu0 %v263
    %295 = vmatprep.subr.mxu0 0.0
    %296 = vmatpush1.msra.mxu0 %v262
    %297 = vmatprep.subr.mxu0 0.0
    %298 = vmatpush1.msra.mxu0 %v261
    %299 = vmatprep.subr.mxu0 0.0
    %300 = vmatpush1.msra.mxu0 %v260
    %301 = vmatprep.subr.mxu0 0.0
    %302 = vmatpush1.msra.mxu0 %v259
    %303 = vmatprep.subr.mxu0 0.0
    %304 = vmatpush1.msra.mxu0 %v258
    %305 = vmatprep.subr.mxu0 0.0
    %306 = vmatpush1.msra.mxu0 %v257
    %307 = vmatprep.subr.mxu0 0.0
    %308 = vmatpush2.msra.mxu0 0.0
    %309 = vmatprep.subr.mxu0 0.0
    %310 = vmatpush2.msra.mxu0 0.0
    %311 = vmatprep.subr.mxu0 0.0
    %312 = vmatpush2.msra.mxu0 0.0
    %313 = vmatprep.subr.mxu0 0.0
    %314 = vmatpush2.msra.mxu0 0.0
    %315 = vmatprep.subr.mxu0 0.0
    %316 = vmatpush2.msra.mxu0 0.0
    %317 = vmatprep.subr.mxu0 0.0
    %318 = vmatpush2.msra.mxu0 0.0
    %319 = vmatprep.subr.mxu0 0.0
    %320 = vmatpush2.msra.mxu0 0.0
    %321 = vmatprep.subr.mxu0 0.0
    %322 = vmatpush2.msra.mxu0 0.0
    %323 = vmatprep.subr.mxu0 0.0
    %324 = vmatpush2.msra.mxu0 0.0
    %325 = vmatprep.subr.mxu0 0.0
    %326 = vmatpush2.msra.mxu0 0.0
    %327 = vmatprep.subr.mxu0 0.0
    %328 = vmatpush2.msra.mxu0 0.0
    %329 = vmatprep.subr.mxu0 0.0
    %330 = vmatpush2.msra.mxu0 0.0
    %331 = vmatprep.subr.mxu0 0.0
    %332 = vmatpush2.msra.mxu0 0.0
    %333 = vmatprep.subr.mxu0 0.0
    %334 = vmatpush2.msra.mxu0 0.0
    %335 = vmatprep.subr.mxu0 0.0
    %336 = vmatpush2.msra.mxu0 0.0
    %337 = vmatprep.subr.mxu0 0.0
    %338 = vmatpush2.msra.mxu0 0.0
    %339 = vmatprep.mubr.f32.mxu0 0.0
    %340 = vmatmul.mubr.f32.gmra.mxu0 %v273
    %v341 = vpop.f32.mrf.mxu0
    %v342 = vadd.f32 %v270, %v341
    %v343 = vpop.f32.mrf.mxu0
    %344 = vdwg.mxu0
    %v345 = vmax.f32 %v342, 0.0
    %v346 = vld [vmem:[#allocation7] sm:$0xff]
    %v347 = vld [vmem:[#allocation7 + $0x8] sm:$0xff]
    %v348 = vld [vmem:[#allocation7 + $0x10] sm:$0xff]
    %v349 = vld [vmem:[#allocation7 + $0x18] sm:$0xff]
    %v350 = vld [vmem:[#allocation7 + $0x20] sm:$0xff]
    %v351 = vld [vmem:[#allocation7 + $0x28] sm:$0xff]
    %v352 = vld [vmem:[#allocation7 + $0x30] sm:$0xff]
    %v353 = vld [vmem:[#allocation7 + $0x38] sm:$0xff]
    %v354 = vld [vmem:[%s8] sm:$0x1]
    %v356 = vlaneseq
    %v357 = vshrl.u32 %v356, 7
    %v358 = vsub.s32 0, %v357
    %v359 = vrot.slane %v354, %v358
    %v362 = vsel %vm182, %v345, 0
    %364 = vmatprep.subr.mxu0 0.0
    %365 = vmatpush1.msra.mxu0 0.0
    %366 = vmatprep.subr.mxu0 0.0
    %367 = vmatpush1.msra.mxu0 0.0
    %368 = vmatprep.subr.mxu0 0.0
    %369 = vmatpush1.msra.mxu0 0.0
    %370 = vmatprep.subr.mxu0 0.0
    %371 = vmatpush1.msra.mxu0 0.0
    %372 = vmatprep.subr.mxu0 0.0
    %373 = vmatpush1.msra.mxu0 0.0
    %374 = vmatprep.subr.mxu0 0.0
    %375 = vmatpush1.msra.mxu0 0.0
    %376 = vmatprep.subr.mxu0 0.0
    %377 = vmatpush1.msra.mxu0 0.0
    %378 = vmatprep.subr.mxu0 0.0
    %379 = vmatpush1.msra.mxu0 0.0
    %380 = vmatprep.subr.mxu0 0.0
    %381 = vmatpush1.msra.mxu0 %v353
    %382 = vmatprep.subr.mxu0 0.0
    %383 = vmatpush1.msra.mxu0 %v352
    %384 = vmatprep.subr.mxu0 0.0
    %385 = vmatpush1.msra.mxu0 %v351
    %386 = vmatprep.subr.mxu0 0.0
    %387 = vmatpush1.msra.mxu0 %v350
    %388 = vmatprep.subr.mxu0 0.0
    %389 = vmatpush1.msra.mxu0 %v349
    %390 = vmatprep.subr.mxu0 0.0
    %391 = vmatpush1.msra.mxu0 %v348
    %392 = vmatprep.subr.mxu0 0.0
    %393 = vmatpush1.msra.mxu0 %v347
    %394 = vmatprep.subr.mxu0 0.0
    %395 = vmatpush1.msra.mxu0 %v346
    %396 = vmatprep.subr.mxu0 0.0
    %397 = vmatpush2.msra.mxu0 0.0
    %398 = vmatprep.subr.mxu0 0.0
    %399 = vmatpush2.msra.mxu0 0.0
    %400 = vmatprep.subr.mxu0 0.0
    %401 = vmatpush2.msra.mxu0 0.0
    %402 = vmatprep.subr.mxu0 0.0
    %403 = vmatpush2.msra.mxu0 0.0
    %404 = vmatprep.subr.mxu0 0.0
    %405 = vmatpush2.msra.mxu0 0.0
    %406 = vmatprep.subr.mxu0 0.0
    %407 = vmatpush2.msra.mxu0 0.0
    %408 = vmatprep.subr.mxu0 0.0
    %409 = vmatpush2.msra.mxu0 0.0
    %410 = vmatprep.subr.mxu0 0.0
    %411 = vmatpush2.msra.mxu0 0.0
    %412 = vmatprep.subr.mxu0 0.0
    %413 = vmatpush2.msra.mxu0 0.0
    %414 = vmatprep.subr.mxu0 0.0
    %415 = vmatpush2.msra.mxu0 0.0
    %416 = vmatprep.subr.mxu0 0.0
    %417 = vmatpush2.msra.mxu0 0.0
    %418 = vmatprep.subr.mxu0 0.0
    %419 = vmatpush2.msra.mxu0 0.0
    %420 = vmatprep.subr.mxu0 0.0
    %421 = vmatpush2.msra.mxu0 0.0
    %422 = vmatprep.subr.mxu0 0.0
    %423 = vmatpush2.msra.mxu0 0.0
    %424 = vmatprep.subr.mxu0 0.0
    %425 = vmatpush2.msra.mxu0 0.0
    %426 = vmatprep.subr.mxu0 0.0
    %427 = vmatpush2.msra.mxu0 0.0
    %428 = vmatprep.mubr.f32.mxu0 0.0
    %429 = vmatmul.mubr.f32.gmra.mxu0 %v362
    %v430 = vpop.f32.mrf.mxu0
    %v431 = vadd.f32 %v359, %v430
    %v432 = vpop.f32.mrf.mxu0
    %433 = vdwg.mxu0
    %v434 = vmax.f32 %v431, 0.0
    %v435 = vld [vmem:[%s9] sm:$0xff]
    %v436 = vld [vmem:[%s9 + $0x8] sm:$0xff]
    %v437 = vld [vmem:[%s9 + $0x10] sm:$0xff]
    %v438 = vld [vmem:[%s9 + $0x18] sm:$0xff]
    %v439 = vld [vmem:[%s9 + $0x20] sm:$0xff]
    %v440 = vld [vmem:[%s9 + $0x28] sm:$0xff]
    %v441 = vld [vmem:[%s9 + $0x30] sm:$0xff]
    %v442 = vld [vmem:[%s9 + $0x38] sm:$0xff]
    %v443 = vld [vmem:[%s10] sm:$0x1]
    %v445 = vlaneseq
    %v446 = vshrl.u32 %v445, 7
    %v447 = vsub.s32 0, %v446
    %v448 = vrot.slane %v443, %v447
    %v451 = vsel %vm182, %v434, 0
    %453 = vmatprep.subr.mxu0 0.0
    %454 = vmatpush1.msra.mxu0 0.0
    %455 = vmatprep.subr.mxu0 0.0
    %456 = vmatpush1.msra.mxu0 0.0
    %457 = vmatprep.subr.mxu0 0.0
    %458 = vmatpush1.msra.mxu0 0.0
    %459 = vmatprep.subr.mxu0 0.0
    %460 = vmatpush1.msra.mxu0 0.0
    %461 = vmatprep.subr.mxu0 0.0
    %462 = vmatpush1.msra.mxu0 0.0
    %463 = vmatprep.subr.mxu0 0.0
    %464 = vmatpush1.msra.mxu0 0.0
    %465 = vmatprep.subr.mxu0 0.0
    %466 = vmatpush1.msra.mxu0 0.0
    %467 = vmatprep.subr.mxu0 0.0
    %468 = vmatpush1.msra.mxu0 0.0
    %469 = vmatprep.subr.mxu0 0.0
    %470 = vmatpush1.msra.mxu0 %v442
    %471 = vmatprep.subr.mxu0 0.0
    %472 = vmatpush1.msra.mxu0 %v441
    %473 = vmatprep.subr.mxu0 0.0
    %474 = vmatpush1.msra.mxu0 %v440
    %475 = vmatprep.subr.mxu0 0.0
    %476 = vmatpush1.msra.mxu0 %v439
    %477 = vmatprep.subr.mxu0 0.0
    %478 = vmatpush1.msra.mxu0 %v438
    %479 = vmatprep.subr.mxu0 0.0
    %480 = vmatpush1.msra.mxu0 %v437
    %481 = vmatprep.subr.mxu0 0.0
    %482 = vmatpush1.msra.mxu0 %v436
    %483 = vmatprep.subr.mxu0 0.0
    %484 = vmatpush1.msra.mxu0 %v435
    %485 = vmatprep.subr.mxu0 0.0
    %486 = vmatpush2.msra.mxu0 0.0
    %487 = vmatprep.subr.mxu0 0.0
    %488 = vmatpush2.msra.mxu0 0.0
    %489 = vmatprep.subr.mxu0 0.0
    %490 = vmatpush2.msra.mxu0 0.0
    %491 = vmatprep.subr.mxu0 0.0
    %492 = vmatpush2.msra.mxu0 0.0
    %493 = vmatprep.subr.mxu0 0.0
    %494 = vmatpush2.msra.mxu0 0.0
    %495 = vmatprep.subr.mxu0 0.0
    %496 = vmatpush2.msra.mxu0 0.0
    %497 = vmatprep.subr.mxu0 0.0
    %498 = vmatpush2.msra.mxu0 0.0
    %499 = vmatprep.subr.mxu0 0.0
    %500 = vmatpush2.msra.mxu0 0.0
    %501 = vmatprep.subr.mxu0 0.0
    %502 = vmatpush2.msra.mxu0 0.0
    %503 = vmatprep.subr.mxu0 0.0
    %504 = vmatpush2.msra.mxu0 0.0
    %505 = vmatprep.subr.mxu0 0.0
    %506 = vmatpush2.msra.mxu0 0.0
    %507 = vmatprep.subr.mxu0 0.0
    %508 = vmatpush2.msra.mxu0 0.0
    %509 = vmatprep.subr.mxu0 0.0
    %510 = vmatpush2.msra.mxu0 0.0
    %511 = vmatprep.subr.mxu0 0.0
    %512 = vmatpush2.msra.mxu0 0.0
    %513 = vmatprep.subr.mxu0 0.0
    %514 = vmatpush2.msra.mxu0 0.0
    %515 = vmatprep.subr.mxu0 0.0
    %516 = vmatpush2.msra.mxu0 0.0
    %517 = vmatprep.mubr.f32.mxu0 0.0
    %518 = vmatmul.mubr.f32.gmra.mxu0 %v451
    %v519 = vpop.f32.mrf.mxu0
    %v520 = vadd.f32 %v448, %v519
    %v521 = vpop.f32.mrf.mxu0
    %522 = vdwg.mxu0
    %vm523 = vcmask 130048
    %524 = vst.msk [vmem:[#allocation8] sm:$0xff] %vm523, %v520
    // Predicated region
    $region58: #{tpu_custom_call.1} parent=1 // pred_check
      _
    $region59: #{tpu_custom_call.1} parent=1 // pred_check_branch
      %526 = sbr.rel (0) target = $region61
    $region60: #{tpu_custom_call.1} parent=1 // pred_region
      %s528 = ssub.s32 128, 128
      %529 = vsyncadd [#allocation4], %s528
      %s531 = sshll.u32 [#allocation8], 4
      %s532 = int_to_ptr.vmem [resolvable:$true] %s531
      %534 = dma.vmem_to_hbm [thread:$0]  %s532, 128, %s11, [#allocation4]
    $region61: #{tpu_custom_call.1} parent=1 // pred_fallthru
      _
    // Predicated region
    $region62: #{tpu_custom_call.1} parent=1 // pred_check
      _
    $region63: #{tpu_custom_call.1} parent=1 // pred_check_branch
      %536 = sbr.rel (0) target = $region65
    $region64: #{tpu_custom_call.1} parent=1 // pred_region
      %537 = dma.done [#allocation4], 128
    $region65: #{tpu_custom_call.1} parent=1 // pred_fallthru
      _
    %538 = vsyncpa [#allocation3], 1
    %539 = vsyncpa [#allocation6], 1
    %540 = vsyncpa [#allocation4], 1

</llo_original>
